<compile_context>
chip_gen: v5e
topology: v5e:2x2
jax: 0.10.0
libtpu: 0.0.40
codegen_flags: <defaults>
</compile_context>

<pallas_src>
import functools

import jax
import jax.numpy as jnp
from jax.experimental import pallas as pl
from jax.experimental.pallas import tpu as pltpu


def _round_up(n, m):
    return ((n + m - 1) // m) * m


def _rnn_kernel(num_layers, seq_len,
                x_ref,      # (T*Bp, I)             time-major, batch-padded input
                w0_ref,     # (I, Hp)               layer-0 input->hidden weight
                whh0_ref,   # (Hp, Hp)              layer-0 hidden->hidden weight
                wcat_ref,   # (L-1, 2Hp, Hp)        fused [W_ih; W_hh], layers 1..L-1
                b_ref,      # (L, 1, Hp) f32        combined bias b_ih + b_hh
                fcw_ref,    # (Hp, Cp)              fc weight
                fcb_ref,    # (1, Cp) f32           fc bias
                out_ref,    # (Bp, Cp) f32          output logits (padded)
                xproj_ref): # (T*Bp, Hp) f32        VMEM scratch for x @ W_ih0 + b0
    T, L = seq_len, num_layers
    Bp = x_ref.shape[0] // T
    Hp = whh0_ref.shape[0]
    wdt = whh0_ref.dtype

    # Hoist the x-dependent layer-0 projection (and its bias) off the
    # recurrent critical path: one (T*Bp, I) @ (I, Hp) matmul for all
    # timesteps, result parked in VMEM scratch (not in vregs).
    xproj_ref[...] = (
        jnp.dot(x_ref[...], w0_ref[...], preferred_element_type=jnp.float32)
        + b_ref[0])

    # Hidden states are the only values that need to live in registers.
    h = [jnp.zeros((Bp, Hp), jnp.float32) for _ in range(L)]

    # Wavefront unroll: cells (t, l) on a diagonal d = t + l only depend on
    # diagonal d-1, so the matmuls within a diagonal are independent and can
    # overlap in the MXU instead of forming one long serial chain.
    for d in range(T + L - 1):
        new_h = {}
        for l in range(L):
            t = d - l
            if t < 0 or t >= T:
                continue
            if l == 0:
                pre = (xproj_ref[t * Bp:(t + 1) * Bp, :]
                       + jnp.dot(h[0].astype(wdt), whh0_ref[...],
                                 preferred_element_type=jnp.float32))
            else:
                # Fused [h_below | h_prev] @ [W_ih ; W_hh]: one MXU pass per
                # layer (concat is lane-aligned: Hp is a multiple of 128).
                cat = jnp.concatenate(
                    [h[l - 1].astype(wdt), h[l].astype(wdt)], axis=-1)
                pre = (jnp.dot(cat, wcat_ref[l - 1],
                               preferred_element_type=jnp.float32)
                       + b_ref[l])
            new_h[l] = jnp.tanh(pre)
        for l, v in new_h.items():   # commit the whole diagonal at once
            h[l] = v

    # FC head on the last timestep's top-layer hidden state.
    logits = (jnp.dot(h[L - 1].astype(fcw_ref.dtype), fcw_ref[...],
                      preferred_element_type=jnp.float32)
              + fcb_ref[...])
    out_ref[...] = logits.astype(out_ref.dtype)


def _prepare_params(params, *, num_layers, hidden_size, num_classes, Hp, Cp,
                    dtype):
    """Zero-pad to lane width, fuse W_ih/W_hh for layers >= 1, cast to dtype.

    Zero padding is inert: tanh(0) = 0 and padded weight rows/cols are zero,
    so padded hidden lanes stay exactly 0 and contribute nothing.
    Biases stay f32 (they are added after the f32-accumulated matmul).
    """
    wih0, wih_rest, whh, bias, fc_w, fc_b = params
    _, H = wih0.shape
    L, C = num_layers, num_classes
    pH, pC = Hp - H, Cp - C

    w0_p = jnp.pad(wih0, ((0, 0), (0, pH))).astype(dtype)
    whh0_p = jnp.pad(whh[0], ((0, pH), (0, pH))).astype(dtype)
    if L > 1:
        cats = []
        for l in range(1, L):
            w_ih = jnp.pad(wih_rest[l - 1], ((0, pH), (0, pH)))
            w_hh = jnp.pad(whh[l], ((0, pH), (0, pH)))
            cats.append(jnp.concatenate([w_ih, w_hh], axis=0))   # (2Hp, Hp)
        wcat_p = jnp.stack(cats, axis=0).astype(dtype)
    else:
        # Unused when num_layers == 1: keep the placeholder to a single tile
        # instead of DMAing a dead (1, 2Hp, Hp) slab into VMEM.
        wcat_p = jnp.zeros((1, 8, 128), dtype)
    bias_p = jnp.pad(bias, ((0, 0), (0, 0), (0, pH)))             # f32
    fcw_p = jnp.pad(fc_w, ((0, pH), (0, pC))).astype(dtype)
    fcb_p = jnp.pad(fc_b, ((0, 0), (0, pC)))                      # f32
    return w0_p, whh0_p, wcat_p, bias_p, fcw_p, fcb_p


def rnn_forward(x, params, *, num_layers, hidden_size, num_classes,
                compute_dtype=jnp.bfloat16):
    """x: (B, T, I) float32 (batch_first, as in the PyTorch module).

    compute_dtype selects the weight/activation matmul dtype (bf16 by default,
    f32 accumulation; pass jnp.float32 for bit-faithful f32 math).
    """
    B, T, I = x.shape
    H, C, L = hidden_size, num_classes, num_layers
    Hp = _round_up(max(H, 1), 128)     # lane-dense hidden state
    Cp = _round_up(max(C, 1), 128)     # lane-dense logits -> unmasked store
    Bp = _round_up(max(B, 1), 16)      # sublane-dense batch (bf16 packs 16)

    w0_p, whh0_p, wcat_p, bias_p, fcw_p, fcb_p = _prepare_params(
        params, num_layers=L, hidden_size=H, num_classes=C, Hp=Hp, Cp=Cp,
        dtype=compute_dtype)

    # Glue: pad batch, go time-major, flatten (T, Bp, I) -> (T*Bp, I) so the
    # in-kernel layer-0 projection is one matmul and each per-timestep slice
    # is an aligned (Bp, Hp) block of rows.
    x_p = jnp.pad(x, ((0, Bp - B), (0, 0), (0, 0)))
    x2d = jnp.transpose(x_p, (1, 0, 2)).reshape(T * Bp, I).astype(compute_dtype)

    operands = (x2d, w0_p, whh0_p, wcat_p, bias_p, fcw_p, fcb_p)
    op_bytes = sum(int(a.size) * a.dtype.itemsize for a in operands)
    scratch_bytes = T * Bp * Hp * 4
    out_bytes = Bp * Cp * 4
    vmem_limit = int(min(max(2 * (op_bytes + scratch_bytes + out_bytes)
                             + (4 << 20), 32 << 20), 128 << 20))

    kernel = functools.partial(_rnn_kernel, L, T)
    vmem_spec = pl.BlockSpec(memory_space=pltpu.MemorySpace.VMEM)
    out_p = pl.pallas_call(
        kernel,
        out_shape=jax.ShapeDtypeStruct((Bp, Cp), jnp.float32),
        # No grid: single invocation, whole arrays in VMEM, no double-buffering.
        in_specs=[vmem_spec] * len(operands),
        out_specs=vmem_spec,
        scratch_shapes=[pltpu.VMEM((T * Bp, Hp), jnp.float32)],
        compiler_params=pltpu.CompilerParams(vmem_limit_bytes=vmem_limit),
    )(*operands)
    return out_p[:B, :C]


def init_params(key, input_size, hidden_size, num_layers, num_classes):
    """Deterministic init mirroring nn.RNN / nn.Linear parameter shapes.

    Weights are stored transposed relative to PyTorch (so the kernel does
    x @ W instead of x @ W.T): wih0 (I,H), wih_rest (L-1,H,H), whh (L,H,H).
    Bias is the combined b_ih + b_hh per layer, shape (L,1,H).
    """
    I, H, L, C = input_size, hidden_size, num_layers, num_classes
    k = 1.0 / jnp.sqrt(jnp.float32(H))
    keys = jax.random.split(key, 6)
    wih0 = jax.random.uniform(keys[0], (I, H), jnp.float32, -k, k)
    n_rest = max(L - 1, 1)
    wih_rest = jax.random.uniform(keys[1], (n_rest, H, H), jnp.float32, -k, k)
    whh = jax.random.uniform(keys[2], (L, H, H), jnp.float32, -k, k)
    bias = jax.random.uniform(keys[3], (L, 1, H), jnp.float32, -k, k) * 2.0
    fc_w = jax.random.uniform(keys[4], (H, C), jnp.float32, -k, k)
    fc_b = jax.random.uniform(keys[5], (1, C), jnp.float32, -k, k)
    return wih0, wih_rest, whh, bias, fc_w, fc_b


def rnn_reference(x, params, *, num_layers, hidden_size):
    """Pure-JAX f32 reference of the same forward pass (for verification)."""
    wih0, wih_rest, whh, bias, fc_w, fc_b = params
    B, T, I = x.shape
    L, H = num_layers, hidden_size
    dot = functools.partial(jnp.dot, precision=jax.lax.Precision.HIGHEST)
    h = jnp.zeros((L, B, H), jnp.float32)
    for t in range(T):
        inp = x[:, t, :]
        new_h = []
        for l in range(L):
            w_ih = wih0 if l == 0 else wih_rest[l - 1]
            h_l = jnp.tanh(dot(inp, w_ih) + dot(h[l], whh[l]) + bias[l])
            new_h.append(h_l)
            inp = h_l
        h = jnp.stack(new_h, axis=0)
    return dot(h[L - 1], fc_w) + fc_b


if __name__ == "__main__":
    # Small shapes consistent with the module's forward:
    batch, seq_len = 2, 8
    input_size, hidden_size, num_layers, num_classes = 16, 32, 2, 10

    key = jax.random.PRNGKey(0)
    kx, kp = jax.random.split(key)
    x = jax.random.normal(kx, (batch, seq_len, input_size), jnp.float32)
    params = init_params(kp, input_size, hidden_size, num_layers, num_classes)

    out = rnn_forward(x, params,
                      num_layers=num_layers,
                      hidden_size=hidden_size,
                      num_classes=num_classes,
                      compute_dtype=jnp.bfloat16)
    out = jax.block_until_ready(out)

    ref = rnn_reference(x, params,
                        num_layers=num_layers, hidden_size=hidden_size)
    assert out.shape == (batch, num_classes)
    # bf16 weights/activations with f32 accumulation vs. the f32 reference:
    # tolerance reflects bf16 rounding accumulated over T=8 recurrent steps.
    # (compute_dtype=jnp.float32 reproduces the reference to ~1e-5.)
    if not jnp.allclose(out, ref, rtol=5e-2, atol=5e-2):
        raise AssertionError("Pallas RNN output does not match JAX reference")

    print("KERNEL_OK")
</pallas_src>

<mosaic_0001>
module attributes {stable_mosaic.version = 11 : i64} {
  func.func @_rnn_kernel(%arg0: memref<128x16xbf16, #tpu.memory_space<vmem>>, %arg1: memref<16x128xbf16, #tpu.memory_space<vmem>>, %arg2: memref<128x128xbf16, #tpu.memory_space<vmem>>, %arg3: memref<1x256x128xbf16, #tpu.memory_space<vmem>>, %arg4: memref<2x1x128xf32, #tpu.memory_space<vmem>>, %arg5: memref<128x128xbf16, #tpu.memory_space<vmem>>, %arg6: memref<1x128xf32, #tpu.memory_space<vmem>>, %arg7: memref<16x128xf32, #tpu.memory_space<vmem>>, %arg8: memref<128x128xf32, #tpu.memory_space<vmem>>) attributes {dimension_semantics = [], scalar_prefetch = 0 : i64, scratch_operands = 1 : i64, tpu.core_type = #tpu.core_type<tc>} {
    %c0 = arith.constant 0 : index
    %c0_0 = arith.constant 0 : index
    %0 = vector.load %arg0[%c0, %c0_0] : memref<128x16xbf16, #tpu.memory_space<vmem>>, vector<128x16xbf16>
    %c0_1 = arith.constant 0 : index
    %c0_2 = arith.constant 0 : index
    %1 = vector.load %arg1[%c0_1, %c0_2] : memref<16x128xbf16, #tpu.memory_space<vmem>>, vector<16x128xbf16>
    %cst = arith.constant dense<0.000000e+00> : vector<128x128xf32>
    %2 = tpu.matmul %0, %1, %cst {dimension_numbers = #tpu.dot_dimension_numbers<[1], [0], [0], [1], [0, 0, 1, 1], [], []>} : vector<128x16xbf16>, vector<16x128xbf16>, vector<128x128xf32> -> vector<128x128xf32>
    %c0_3 = arith.constant 0 : index
    %c0_4 = arith.constant 0 : index
    %c0_5 = arith.constant 0 : index
    %3 = vector.load %arg4[%c0_3, %c0_4, %c0_5] : memref<2x1x128xf32, #tpu.memory_space<vmem>>, vector<1x1x128xf32>
    %4 = vector.shape_cast %3 : vector<1x1x128xf32> to vector<1x128xf32>
    %5 = vector.broadcast %4 : vector<1x128xf32> to vector<128x128xf32>
    %6 = arith.addf %2, %5 : vector<128x128xf32>
    %c0_6 = arith.constant 0 : index
    %c0_7 = arith.constant 0 : index
    %7 = vector.load %arg8[%c0_6, %c0_7] : memref<128x128xf32, #tpu.memory_space<vmem>>, vector<128x128xf32>
    tpu.vector_store %arg8[%c0_6, %c0_7], %6 {strides = array<i32>} : memref<128x128xf32, #tpu.memory_space<vmem>>, vector<128x128xf32>,
    %cst_8 = arith.constant 0.000000e+00 : f32
    %8 = vector.broadcast %cst_8 : f32 to vector<16x128xf32>
    %cst_9 = arith.constant 0.000000e+00 : f32
    %9 = vector.broadcast %cst_9 : f32 to vector<16x128xf32>
    %c0_10 = arith.constant 0 : index
    %c0_11 = arith.constant 0 : index
    %10 = vector.load %arg8[%c0_10, %c0_11] : memref<128x128xf32, #tpu.memory_space<vmem>>, vector<16x128xf32>
    %11 = arith.truncf %8 : vector<16x128xf32> to vector<16x128xbf16>
    %c0_12 = arith.constant 0 : index
    %c0_13 = arith.constant 0 : index
    %12 = vector.load %arg2[%c0_12, %c0_13] : memref<128x128xbf16, #tpu.memory_space<vmem>>, vector<128x128xbf16>
    %cst_14 = arith.constant dense<0.000000e+00> : vector<16x128xf32>
    %13 = tpu.matmul %11, %12, %cst_14 {dimension_numbers = #tpu.dot_dimension_numbers<[1], [0], [0], [1], [0, 0, 1, 1], [], []>} : vector<16x128xbf16>, vector<128x128xbf16>, vector<16x128xf32> -> vector<16x128xf32>
    %14 = arith.addf %10, %13 : vector<16x128xf32>
    %15 = math.tanh %14 : vector<16x128xf32>
    %c16 = arith.constant 16 : index
    %c0_15 = arith.constant 0 : index
    %16 = vector.load %arg8[%c16, %c0_15] : memref<128x128xf32, #tpu.memory_space<vmem>>, vector<16x128xf32>
    %17 = arith.truncf %15 : vector<16x128xf32> to vector<16x128xbf16>
    %c0_16 = arith.constant 0 : index
    %c0_17 = arith.constant 0 : index
    %18 = vector.load %arg2[%c0_16, %c0_17] : memref<128x128xbf16, #tpu.memory_space<vmem>>, vector<128x128xbf16>
    %cst_18 = arith.constant dense<0.000000e+00> : vector<16x128xf32>
    %19 = tpu.matmul %17, %18, %cst_18 {dimension_numbers = #tpu.dot_dimension_numbers<[1], [0], [0], [1], [0, 0, 1, 1], [], []>} : vector<16x128xbf16>, vector<128x128xbf16>, vector<16x128xf32> -> vector<16x128xf32>
    %20 = arith.addf %16, %19 : vector<16x128xf32>
    %21 = math.tanh %20 : vector<16x128xf32>
    %22 = arith.truncf %15 : vector<16x128xf32> to vector<16x128xbf16>
    %23 = arith.truncf %9 : vector<16x128xf32> to vector<16x128xbf16>
    %24 = tpu.concatenate %22, %23 in 1 : vector<16x128xbf16>, vector<16x128xbf16> -> vector<16x256xbf16>
    %c0_19 = arith.constant 0 : index
    %c0_20 = arith.constant 0 : index
    %c0_21 = arith.constant 0 : index
    %25 = vector.load %arg3[%c0_19, %c0_20, %c0_21] : memref<1x256x128xbf16, #tpu.memory_space<vmem>>, vector<1x256x128xbf16>
    %26 = vector.shape_cast %25 : vector<1x256x128xbf16> to vector<256x128xbf16>
    %cst_22 = arith.constant dense<0.000000e+00> : vector<16x128xf32>
    %27 = tpu.matmul %24, %26, %cst_22 {dimension_numbers = #tpu.dot_dimension_numbers<[1], [0], [0], [1], [0, 0, 1, 1], [], []>} : vector<16x256xbf16>, vector<256x128xbf16>, vector<16x128xf32> -> vector<16x128xf32>
    %c1 = arith.constant 1 : index
    %c0_23 = arith.constant 0 : index
    %c0_24 = arith.constant 0 : index
    %28 = vector.load %arg4[%c1, %c0_23, %c0_24] : memref<2x1x128xf32, #tpu.memory_space<vmem>>, vector<1x1x128xf32>
    %29 = vector.shape_cast %28 : vector<1x1x128xf32> to vector<1x128xf32>
    %30 = vector.broadcast %29 : vector<1x128xf32> to vector<16x128xf32>
    %31 = arith.addf %27, %30 : vector<16x128xf32>
    %32 = math.tanh %31 : vector<16x128xf32>
    %c32 = arith.constant 32 : index
    %c0_25 = arith.constant 0 : index
    %33 = vector.load %arg8[%c32, %c0_25] : memref<128x128xf32, #tpu.memory_space<vmem>>, vector<16x128xf32>
    %34 = arith.truncf %21 : vector<16x128xf32> to vector<16x128xbf16>
    %c0_26 = arith.constant 0 : index
    %c0_27 = arith.constant 0 : index
    %35 = vector.load %arg2[%c0_26, %c0_27] : memref<128x128xbf16, #tpu.memory_space<vmem>>, vector<128x128xbf16>
    %cst_28 = arith.constant dense<0.000000e+00> : vector<16x128xf32>
    %36 = tpu.matmul %34, %35, %cst_28 {dimension_numbers = #tpu.dot_dimension_numbers<[1], [0], [0], [1], [0, 0, 1, 1], [], []>} : vector<16x128xbf16>, vector<128x128xbf16>, vector<16x128xf32> -> vector<16x128xf32>
    %37 = arith.addf %33, %36 : vector<16x128xf32>
    %38 = math.tanh %37 : vector<16x128xf32>
    %39 = arith.truncf %21 : vector<16x128xf32> to vector<16x128xbf16>
    %40 = arith.truncf %32 : vector<16x128xf32> to vector<16x128xbf16>
    %41 = tpu.concatenate %39, %40 in 1 : vector<16x128xbf16>, vector<16x128xbf16> -> vector<16x256xbf16>
    %c0_29 = arith.constant 0 : index
    %c0_30 = arith.constant 0 : index
    %c0_31 = arith.constant 0 : index
    %42 = vector.load %arg3[%c0_29, %c0_30, %c0_31] : memref<1x256x128xbf16, #tpu.memory_space<vmem>>, vector<1x256x128xbf16>
    %43 = vector.shape_cast %42 : vector<1x256x128xbf16> to vector<256x128xbf16>
    %cst_32 = arith.constant dense<0.000000e+00> : vector<16x128xf32>
    %44 = tpu.matmul %41, %43, %cst_32 {dimension_numbers = #tpu.dot_dimension_numbers<[1], [0], [0], [1], [0, 0, 1, 1], [], []>} : vector<16x256xbf16>, vector<256x128xbf16>, vector<16x128xf32> -> vector<16x128xf32>
    %c1_33 = arith.constant 1 : index
    %c0_34 = arith.constant 0 : index
    %c0_35 = arith.constant 0 : index
    %45 = vector.load %arg4[%c1_33, %c0_34, %c0_35] : memref<2x1x128xf32, #tpu.memory_space<vmem>>, vector<1x1x128xf32>
    %46 = vector.shape_cast %45 : vector<1x1x128xf32> to vector<1x128xf32>
    %47 = vector.broadcast %46 : vector<1x128xf32> to vector<16x128xf32>
    %48 = arith.addf %44, %47 : vector<16x128xf32>
    %49 = math.tanh %48 : vector<16x128xf32>
    %c48 = arith.constant 48 : index
    %c0_36 = arith.constant 0 : index
    %50 = vector.load %arg8[%c48, %c0_36] : memref<128x128xf32, #tpu.memory_space<vmem>>, vector<16x128xf32>
    %51 = arith.truncf %38 : vector<16x128xf32> to vector<16x128xbf16>
    %c0_37 = arith.constant 0 : index
    %c0_38 = arith.constant 0 : index
    %52 = vector.load %arg2[%c0_37, %c0_38] : memref<128x128xbf16, #tpu.memory_space<vmem>>, vector<128x128xbf16>
    %cst_39 = arith.constant dense<0.000000e+00> : vector<16x128xf32>
    %53 = tpu.matmul %51, %52, %cst_39 {dimension_numbers = #tpu.dot_dimension_numbers<[1], [0], [0], [1], [0, 0, 1, 1], [], []>} : vector<16x128xbf16>, vector<128x128xbf16>, vector<16x128xf32> -> vector<16x128xf32>
    %54 = arith.addf %50, %53 : vector<16x128xf32>
    %55 = math.tanh %54 : vector<16x128xf32>
    %56 = arith.truncf %38 : vector<16x128xf32> to vector<16x128xbf16>
    %57 = arith.truncf %49 : vector<16x128xf32> to vector<16x128xbf16>
    %58 = tpu.concatenate %56, %57 in 1 : vector<16x128xbf16>, vector<16x128xbf16> -> vector<16x256xbf16>
    %c0_40 = arith.constant 0 : index
    %c0_41 = arith.constant 0 : index
    %c0_42 = arith.constant 0 : index
    %59 = vector.load %arg3[%c0_40, %c0_41, %c0_42] : memref<1x256x128xbf16, #tpu.memory_space<vmem>>, vector<1x256x128xbf16>
    %60 = vector.shape_cast %59 : vector<1x256x128xbf16> to vector<256x128xbf16>
    %cst_43 = arith.constant dense<0.000000e+00> : vector<16x128xf32>
    %61 = tpu.matmul %58, %60, %cst_43 {dimension_numbers = #tpu.dot_dimension_numbers<[1], [0], [0], [1], [0, 0, 1, 1], [], []>} : vector<16x256xbf16>, vector<256x128xbf16>, vector<16x128xf32> -> vector<16x128xf32>
    %c1_44 = arith.constant 1 : index
    %c0_45 = arith.constant 0 : index
    %c0_46 = arith.constant 0 : index
    %62 = vector.load %arg4[%c1_44, %c0_45, %c0_46] : memref<2x1x128xf32, #tpu.memory_space<vmem>>, vector<1x1x128xf32>
    %63 = vector.shape_cast %62 : vector<1x1x128xf32> to vector<1x128xf32>
    %64 = vector.broadcast %63 : vector<1x128xf32> to vector<16x128xf32>
    %65 = arith.addf %61, %64 : vector<16x128xf32>
    %66 = math.tanh %65 : vector<16x128xf32>
    %c64 = arith.constant 64 : index
    %c0_47 = arith.constant 0 : index
    %67 = vector.load %arg8[%c64, %c0_47] : memref<128x128xf32, #tpu.memory_space<vmem>>, vector<16x128xf32>
    %68 = arith.truncf %55 : vector<16x128xf32> to vector<16x128xbf16>
    %c0_48 = arith.constant 0 : index
    %c0_49 = arith.constant 0 : index
    %69 = vector.load %arg2[%c0_48, %c0_49] : memref<128x128xbf16, #tpu.memory_space<vmem>>, vector<128x128xbf16>
    %cst_50 = arith.constant dense<0.000000e+00> : vector<16x128xf32>
    %70 = tpu.matmul %68, %69, %cst_50 {dimension_numbers = #tpu.dot_dimension_numbers<[1], [0], [0], [1], [0, 0, 1, 1], [], []>} : vector<16x128xbf16>, vector<128x128xbf16>, vector<16x128xf32> -> vector<16x128xf32>
    %71 = arith.addf %67, %70 : vector<16x128xf32>
    %72 = math.tanh %71 : vector<16x128xf32>
    %73 = arith.truncf %55 : vector<16x128xf32> to vector<16x128xbf16>
    %74 = arith.truncf %66 : vector<16x128xf32> to vector<16x128xbf16>
    %75 = tpu.concatenate %73, %74 in 1 : vector<16x128xbf16>, vector<16x128xbf16> -> vector<16x256xbf16>
    %c0_51 = arith.constant 0 : index
    %c0_52 = arith.constant 0 : index
    %c0_53 = arith.constant 0 : index
    %76 = vector.load %arg3[%c0_51, %c0_52, %c0_53] : memref<1x256x128xbf16, #tpu.memory_space<vmem>>, vector<1x256x128xbf16>
    %77 = vector.shape_cast %76 : vector<1x256x128xbf16> to vector<256x128xbf16>
    %cst_54 = arith.constant dense<0.000000e+00> : vector<16x128xf32>
    %78 = tpu.matmul %75, %77, %cst_54 {dimension_numbers = #tpu.dot_dimension_numbers<[1], [0], [0], [1], [0, 0, 1, 1], [], []>} : vector<16x256xbf16>, vector<256x128xbf16>, vector<16x128xf32> -> vector<16x128xf32>
    %c1_55 = arith.constant 1 : index
    %c0_56 = arith.constant 0 : index
    %c0_57 = arith.constant 0 : index
    %79 = vector.load %arg4[%c1_55, %c0_56, %c0_57] : memref<2x1x128xf32, #tpu.memory_space<vmem>>, vector<1x1x128xf32>
    %80 = vector.shape_cast %79 : vector<1x1x128xf32> to vector<1x128xf32>
    %81 = vector.broadcast %80 : vector<1x128xf32> to vector<16x128xf32>
    %82 = arith.addf %78, %81 : vector<16x128xf32>
    %83 = math.tanh %82 : vector<16x128xf32>
    %c80 = arith.constant 80 : index
    %c0_58 = arith.constant 0 : index
    %84 = vector.load %arg8[%c80, %c0_58] : memref<128x128xf32, #tpu.memory_space<vmem>>, vector<16x128xf32>
    %85 = arith.truncf %72 : vector<16x128xf32> to vector<16x128xbf16>
    %c0_59 = arith.constant 0 : index
    %c0_60 = arith.constant 0 : index
    %86 = vector.load %arg2[%c0_59, %c0_60] : memref<128x128xbf16, #tpu.memory_space<vmem>>, vector<128x128xbf16>
    %cst_61 = arith.constant dense<0.000000e+00> : vector<16x128xf32>
    %87 = tpu.matmul %85, %86, %cst_61 {dimension_numbers = #tpu.dot_dimension_numbers<[1], [0], [0], [1], [0, 0, 1, 1], [], []>} : vector<16x128xbf16>, vector<128x128xbf16>, vector<16x128xf32> -> vector<16x128xf32>
    %88 = arith.addf %84, %87 : vector<16x128xf32>
    %89 = math.tanh %88 : vector<16x128xf32>
    %90 = arith.truncf %72 : vector<16x128xf32> to vector<16x128xbf16>
    %91 = arith.truncf %83 : vector<16x128xf32> to vector<16x128xbf16>
    %92 = tpu.concatenate %90, %91 in 1 : vector<16x128xbf16>, vector<16x128xbf16> -> vector<16x256xbf16>
    %c0_62 = arith.constant 0 : index
    %c0_63 = arith.constant 0 : index
    %c0_64 = arith.constant 0 : index
    %93 = vector.load %arg3[%c0_62, %c0_63, %c0_64] : memref<1x256x128xbf16, #tpu.memory_space<vmem>>, vector<1x256x128xbf16>
    %94 = vector.shape_cast %93 : vector<1x256x128xbf16> to vector<256x128xbf16>
    %cst_65 = arith.constant dense<0.000000e+00> : vector<16x128xf32>
    %95 = tpu.matmul %92, %94, %cst_65 {dimension_numbers = #tpu.dot_dimension_numbers<[1], [0], [0], [1], [0, 0, 1, 1], [], []>} : vector<16x256xbf16>, vector<256x128xbf16>, vector<16x128xf32> -> vector<16x128xf32>
    %c1_66 = arith.constant 1 : index
    %c0_67 = arith.constant 0 : index
    %c0_68 = arith.constant 0 : index
    %96 = vector.load %arg4[%c1_66, %c0_67, %c0_68] : memref<2x1x128xf32, #tpu.memory_space<vmem>>, vector<1x1x128xf32>
    %97 = vector.shape_cast %96 : vector<1x1x128xf32> to vector<1x128xf32>
    %98 = vector.broadcast %97 : vector<1x128xf32> to vector<16x128xf32>
    %99 = arith.addf %95, %98 : vector<16x128xf32>
    %100 = math.tanh %99 : vector<16x128xf32>
    %c96 = arith.constant 96 : index
    %c0_69 = arith.constant 0 : index
    %101 = vector.load %arg8[%c96, %c0_69] : memref<128x128xf32, #tpu.memory_space<vmem>>, vector<16x128xf32>
    %102 = arith.truncf %89 : vector<16x128xf32> to vector<16x128xbf16>
    %c0_70 = arith.constant 0 : index
    %c0_71 = arith.constant 0 : index
    %103 = vector.load %arg2[%c0_70, %c0_71] : memref<128x128xbf16, #tpu.memory_space<vmem>>, vector<128x128xbf16>
    %cst_72 = arith.constant dense<0.000000e+00> : vector<16x128xf32>
    %104 = tpu.matmul %102, %103, %cst_72 {dimension_numbers = #tpu.dot_dimension_numbers<[1], [0], [0], [1], [0, 0, 1, 1], [], []>} : vector<16x128xbf16>, vector<128x128xbf16>, vector<16x128xf32> -> vector<16x128xf32>
    %105 = arith.addf %101, %104 : vector<16x128xf32>
    %106 = math.tanh %105 : vector<16x128xf32>
    %107 = arith.truncf %89 : vector<16x128xf32> to vector<16x128xbf16>
    %108 = arith.truncf %100 : vector<16x128xf32> to vector<16x128xbf16>
    %109 = tpu.concatenate %107, %108 in 1 : vector<16x128xbf16>, vector<16x128xbf16> -> vector<16x256xbf16>
    %c0_73 = arith.constant 0 : index
    %c0_74 = arith.constant 0 : index
    %c0_75 = arith.constant 0 : index
    %110 = vector.load %arg3[%c0_73, %c0_74, %c0_75] : memref<1x256x128xbf16, #tpu.memory_space<vmem>>, vector<1x256x128xbf16>
    %111 = vector.shape_cast %110 : vector<1x256x128xbf16> to vector<256x128xbf16>
    %cst_76 = arith.constant dense<0.000000e+00> : vector<16x128xf32>
    %112 = tpu.matmul %109, %111, %cst_76 {dimension_numbers = #tpu.dot_dimension_numbers<[1], [0], [0], [1], [0, 0, 1, 1], [], []>} : vector<16x256xbf16>, vector<256x128xbf16>, vector<16x128xf32> -> vector<16x128xf32>
    %c1_77 = arith.constant 1 : index
    %c0_78 = arith.constant 0 : index
    %c0_79 = arith.constant 0 : index
    %113 = vector.load %arg4[%c1_77, %c0_78, %c0_79] : memref<2x1x128xf32, #tpu.memory_space<vmem>>, vector<1x1x128xf32>
    %114 = vector.shape_cast %113 : vector<1x1x128xf32> to vector<1x128xf32>
    %115 = vector.broadcast %114 : vector<1x128xf32> to vector<16x128xf32>
    %116 = arith.addf %112, %115 : vector<16x128xf32>
    %117 = math.tanh %116 : vector<16x128xf32>
    %c112 = arith.constant 112 : index
    %c0_80 = arith.constant 0 : index
    %118 = vector.load %arg8[%c112, %c0_80] : memref<128x128xf32, #tpu.memory_space<vmem>>, vector<16x128xf32>
    %119 = arith.truncf %106 : vector<16x128xf32> to vector<16x128xbf16>
    %c0_81 = arith.constant 0 : index
    %c0_82 = arith.constant 0 : index
    %120 = vector.load %arg2[%c0_81, %c0_82] : memref<128x128xbf16, #tpu.memory_space<vmem>>, vector<128x128xbf16>
    %cst_83 = arith.constant dense<0.000000e+00> : vector<16x128xf32>
    %121 = tpu.matmul %119, %120, %cst_83 {dimension_numbers = #tpu.dot_dimension_numbers<[1], [0], [0], [1], [0, 0, 1, 1], [], []>} : vector<16x128xbf16>, vector<128x128xbf16>, vector<16x128xf32> -> vector<16x128xf32>
    %122 = arith.addf %118, %121 : vector<16x128xf32>
    %123 = math.tanh %122 : vector<16x128xf32>
    %124 = arith.truncf %106 : vector<16x128xf32> to vector<16x128xbf16>
    %125 = arith.truncf %117 : vector<16x128xf32> to vector<16x128xbf16>
    %126 = tpu.concatenate %124, %125 in 1 : vector<16x128xbf16>, vector<16x128xbf16> -> vector<16x256xbf16>
    %c0_84 = arith.constant 0 : index
    %c0_85 = arith.constant 0 : index
    %c0_86 = arith.constant 0 : index
    %127 = vector.load %arg3[%c0_84, %c0_85, %c0_86] : memref<1x256x128xbf16, #tpu.memory_space<vmem>>, vector<1x256x128xbf16>
    %128 = vector.shape_cast %127 : vector<1x256x128xbf16> to vector<256x128xbf16>
    %cst_87 = arith.constant dense<0.000000e+00> : vector<16x128xf32>
    %129 = tpu.matmul %126, %128, %cst_87 {dimension_numbers = #tpu.dot_dimension_numbers<[1], [0], [0], [1], [0, 0, 1, 1], [], []>} : vector<16x256xbf16>, vector<256x128xbf16>, vector<16x128xf32> -> vector<16x128xf32>
    %c1_88 = arith.constant 1 : index
    %c0_89 = arith.constant 0 : index
    %c0_90 = arith.constant 0 : index
    %130 = vector.load %arg4[%c1_88, %c0_89, %c0_90] : memref<2x1x128xf32, #tpu.memory_space<vmem>>, vector<1x1x128xf32>
    %131 = vector.shape_cast %130 : vector<1x1x128xf32> to vector<1x128xf32>
    %132 = vector.broadcast %131 : vector<1x128xf32> to vector<16x128xf32>
    %133 = arith.addf %129, %132 : vector<16x128xf32>
    %134 = math.tanh %133 : vector<16x128xf32>
    %135 = arith.truncf %123 : vector<16x128xf32> to vector<16x128xbf16>
    %136 = arith.truncf %134 : vector<16x128xf32> to vector<16x128xbf16>
    %137 = tpu.concatenate %135, %136 in 1 : vector<16x128xbf16>, vector<16x128xbf16> -> vector<16x256xbf16>
    %c0_91 = arith.constant 0 : index
    %c0_92 = arith.constant 0 : index
    %c0_93 = arith.constant 0 : index
    %138 = vector.load %arg3[%c0_91, %c0_92, %c0_93] : memref<1x256x128xbf16, #tpu.memory_space<vmem>>, vector<1x256x128xbf16>
    %139 = vector.shape_cast %138 : vector<1x256x128xbf16> to vector<256x128xbf16>
    %cst_94 = arith.constant dense<0.000000e+00> : vector<16x128xf32>
    %140 = tpu.matmul %137, %139, %cst_94 {dimension_numbers = #tpu.dot_dimension_numbers<[1], [0], [0], [1], [0, 0, 1, 1], [], []>} : vector<16x256xbf16>, vector<256x128xbf16>, vector<16x128xf32> -> vector<16x128xf32>
    %c1_95 = arith.constant 1 : index
    %c0_96 = arith.constant 0 : index
    %c0_97 = arith.constant 0 : index
    %141 = vector.load %arg4[%c1_95, %c0_96, %c0_97] : memref<2x1x128xf32, #tpu.memory_space<vmem>>, vector<1x1x128xf32>
    %142 = vector.shape_cast %141 : vector<1x1x128xf32> to vector<1x128xf32>
    %143 = vector.broadcast %142 : vector<1x128xf32> to vector<16x128xf32>
    %144 = arith.addf %140, %143 : vector<16x128xf32>
    %145 = math.tanh %144 : vector<16x128xf32>
    %146 = arith.truncf %145 : vector<16x128xf32> to vector<16x128xbf16>
    %c0_98 = arith.constant 0 : index
    %c0_99 = arith.constant 0 : index
    %147 = vector.load %arg5[%c0_98, %c0_99] : memref<128x128xbf16, #tpu.memory_space<vmem>>, vector<128x128xbf16>
    %cst_100 = arith.constant dense<0.000000e+00> : vector<16x128xf32>
    %148 = tpu.matmul %146, %147, %cst_100 {dimension_numbers = #tpu.dot_dimension_numbers<[1], [0], [0], [1], [0, 0, 1, 1], [], []>} : vector<16x128xbf16>, vector<128x128xbf16>, vector<16x128xf32> -> vector<16x128xf32>
    %c0_101 = arith.constant 0 : index
    %c0_102 = arith.constant 0 : index
    %149 = vector.load %arg6[%c0_101, %c0_102] : memref<1x128xf32, #tpu.memory_space<vmem>>, vector<1x128xf32>
    %150 = vector.broadcast %149 : vector<1x128xf32> to vector<16x128xf32>
    %151 = arith.addf %148, %150 : vector<16x128xf32>
    %c0_103 = arith.constant 0 : index
    %c0_104 = arith.constant 0 : index
    %152 = vector.load %arg7[%c0_103, %c0_104] : memref<16x128xf32, #tpu.memory_space<vmem>>, vector<16x128xf32>
    tpu.vector_store %arg7[%c0_103, %c0_104], %151 {strides = array<i32>} : memref<16x128xf32, #tpu.memory_space<vmem>>, vector<16x128xf32>,
    return
  }
}

</mosaic_0001>

<llo_original>
// kernel: tpu_custom_call.1
$region0: #{tpu_custom_call.1}
  #allocation0 [shape = 'u32[]', space=smem, size = 0x4, offset = 0x4, fixed_abs, tag = 'smem constant byte address 0x4 - core index']
  #allocation1 [shape = 'u32[72,128]{1,0:T(1,128)}', space=vmem, size = 0x9000, scoped, tag = 'internal scratch']
  #allocation2 [shape = 'f32[128,128]{1,0:T(8,128)}', space=vmem, size = 0x10000, scoped, tag = 'scratch operand']
  %s0 = inlined_call_operand.vmem [shape: bf16[128,16], index: 0, kind: input, shape index: {}]
  %s1 = inlined_call_operand.vmem [shape: bf16[16,128], index: 1, kind: input, shape index: {}]
  %s2 = inlined_call_operand.vmem [shape: bf16[128,128], index: 2, kind: input, shape index: {}]
  %s3 = inlined_call_operand.hbm [shape: bf16[1,256,128], index: 3, kind: input, shape index: {}]
  %s4 = inlined_call_operand.vmem [shape: f32[2,1,128], index: 4, kind: input, shape index: {}]
  %s5 = inlined_call_operand.hbm [shape: bf16[128,128], index: 5, kind: input, shape index: {}]
  %s6 = inlined_call_operand.vmem [shape: f32[1,128], index: 6, kind: input, shape index: {}]
  %s7 = inlined_call_operand.hbm [shape: f32[16,128], index: 7, kind: output, shape index: {}]
  %s8 = sld [smem:[#allocation0]]
  $region46: #{tpu_custom_call.1} parent=0
    _
  %s10 = ssub.s32 1, %s8
  %s11 = scalar_select 0, %s10, %s8
  $region1: #{tpu_custom_call.1} parent=0
    #allocation3 [shape = 'u8[65536]{0}', space=vmem, size = 0x10000, scoped, tag = 'input window, operand 3, single buffered']
    #allocation4 [shape = 's32[1]{0}', space=sflag, size = 0x4, scoped, tag = 'scoped memory for tpu_custom_call.1']
    #allocation5 [shape = 's32[1]{0}', space=sflag, size = 0x4, scoped, tag = 'scoped memory for tpu_custom_call.1']
    #allocation6 [shape = 'u8[32768]{0}', space=vmem, size = 0x8000, scoped, tag = 'input window, operand 5, single buffered']
    #allocation7 [shape = 's32[1]{0}', space=sflag, size = 0x4, scoped, tag = 'scoped memory for tpu_custom_call.1']
    #allocation8 [shape = 'u8[8192]{0}', space=vmem, size = 0x2000, scoped, tag = 'output window, operand 0, single buffered']
    %12 = vsyncpa [#allocation4], 0
    %13 = vsyncpa [#allocation7], 0
    %14 = vsyncpa [#allocation5], 0
    // Predicated region
    $region2: #{tpu_custom_call.1} parent=1 // pred_check
      _
    $region3: #{tpu_custom_call.1} parent=1 // pred_check_branch
      %16 = sbr.rel (0) target = $region5
    $region4: #{tpu_custom_call.1} parent=1 // pred_region
      _
    $region5: #{tpu_custom_call.1} parent=1 // pred_fallthru
      _
    // Predicated region
    $region6: #{tpu_custom_call.1} parent=1 // pred_check
      _
    $region7: #{tpu_custom_call.1} parent=1 // pred_check_branch
      %18 = sbr.rel (0) target = $region9
    $region8: #{tpu_custom_call.1} parent=1 // pred_region
      _
    $region9: #{tpu_custom_call.1} parent=1 // pred_fallthru
      _
    // Predicated region
    $region10: #{tpu_custom_call.1} parent=1 // pred_check
      _
    $region11: #{tpu_custom_call.1} parent=1 // pred_check_branch
      %20 = sbr.rel (0) target = $region13
    $region12: #{tpu_custom_call.1} parent=1 // pred_region
      _
    $region13: #{tpu_custom_call.1} parent=1 // pred_fallthru
      _
    // Predicated region
    $region14: #{tpu_custom_call.1} parent=1 // pred_check
      _
    $region15: #{tpu_custom_call.1} parent=1 // pred_check_branch
      %22 = sbr.rel (0) target = $region17
    $region16: #{tpu_custom_call.1} parent=1 // pred_region
      %24 = vsyncadd [#allocation4], 0
      %s25 = sshll.u32 %s3, 4
      %s26 = int_to_ptr.hbm [resolvable:$true] %s25
      %s27 = sshll.u32 [#allocation3], 4
      %s28 = int_to_ptr.vmem [resolvable:$true] %s27
      %33 = dma.hbm_to_vmem [thread:$0]  %s26, 2048, %s28, [#allocation4], 64, 64, 4
    $region17: #{tpu_custom_call.1} parent=1 // pred_fallthru
      _
    // Predicated region
    $region18: #{tpu_custom_call.1} parent=1 // pred_check
      _
    $region19: #{tpu_custom_call.1} parent=1 // pred_check_branch
      %35 = sbr.rel (0) target = $region21
    $region20: #{tpu_custom_call.1} parent=1 // pred_region
      _
    $region21: #{tpu_custom_call.1} parent=1 // pred_fallthru
      _
    // Predicated region
    $region22: #{tpu_custom_call.1} parent=1 // pred_check
      _
    $region23: #{tpu_custom_call.1} parent=1 // pred_check_branch
      %37 = sbr.rel (0) target = $region25
    $region24: #{tpu_custom_call.1} parent=1 // pred_region
      %39 = vsyncadd [#allocation7], 0
      %s40 = sshll.u32 %s5, 4
      %s41 = int_to_ptr.hbm [resolvable:$true] %s40
      %s42 = sshll.u32 [#allocation6], 4
      %s43 = int_to_ptr.vmem [resolvable:$true] %s42
      %48 = dma.hbm_to_vmem [thread:$0]  %s41, 1024, %s43, [#allocation7], 64, 64, 4
    $region25: #{tpu_custom_call.1} parent=1 // pred_fallthru
      _
    // Predicated region
    $region26: #{tpu_custom_call.1} parent=1 // pred_check
      _
    $region27: #{tpu_custom_call.1} parent=1 // pred_check_branch
      %50 = sbr.rel (0) target = $region29
    $region28: #{tpu_custom_call.1} parent=1 // pred_region
      _
    $region29: #{tpu_custom_call.1} parent=1 // pred_fallthru
      _
    // Predicated region
    $region30: #{tpu_custom_call.1} parent=1 // pred_check
      _
    $region31: #{tpu_custom_call.1} parent=1 // pred_check_branch
      %52 = sbr.rel (0) target = $region33
    $region32: #{tpu_custom_call.1} parent=1 // pred_region
      %54 = dma.done [#allocation4], 2048
    $region33: #{tpu_custom_call.1} parent=1 // pred_fallthru
      _
    // Predicated region
    $region34: #{tpu_custom_call.1} parent=1 // pred_check
      _
    $region35: #{tpu_custom_call.1} parent=1 // pred_check_branch
      %56 = sbr.rel (0) target = $region37
    $region36: #{tpu_custom_call.1} parent=1 // pred_region
      %58 = dma.done [#allocation7], 1024
    $region37: #{tpu_custom_call.1} parent=1 // pred_fallthru
      _
    %v60 = vld [vmem:[%s0] sm:$0xf]
    %v61 = vld [vmem:[%s0 + $0x4] sm:$0xf]
    %v62 = vld [vmem:[%s0 + $0x8] sm:$0xf]
    %v63 = vld [vmem:[%s0 + $0xc] sm:$0xf]
    %v64 = vld [vmem:[%s0 + $0x10] sm:$0xf]
    %v65 = vld [vmem:[%s0 + $0x14] sm:$0xf]
    %v66 = vld [vmem:[%s0 + $0x18] sm:$0xf]
    %v67 = vld [vmem:[%s0 + $0x1c] sm:$0xf]
    %v68 = vld [vmem:[%s0 + $0x20] sm:$0xf]
    %v69 = vld [vmem:[%s0 + $0x24] sm:$0xf]
    %v70 = vld [vmem:[%s0 + $0x28] sm:$0xf]
    %v71 = vld [vmem:[%s0 + $0x2c] sm:$0xf]
    %v72 = vld [vmem:[%s0 + $0x30] sm:$0xf]
    %v73 = vld [vmem:[%s0 + $0x34] sm:$0xf]
    %v74 = vld [vmem:[%s0 + $0x38] sm:$0xf]
    %v75 = vld [vmem:[%s0 + $0x3c] sm:$0xf]
    %v76 = vld [vmem:[%s1] sm:$0xf]
    %v77 = vld [vmem:[%s1 + $0x4] sm:$0xf]
    %v78 = vld [vmem:[%s4] sm:$0x1]
    %v80 = vperm.slane %v78, 0
    %v98 = vunpack.c.l.b16 %v60
    %v99 = vunpack.c.l.b16 %v61
    %v100 = vunpack.c.l.b16 %v62
    %v101 = vunpack.c.l.b16 %v63
    %v102 = vunpack.c.l.b16 %v64
    %v103 = vunpack.c.l.b16 %v65
    %v104 = vunpack.c.l.b16 %v66
    %v105 = vunpack.c.l.b16 %v67
    %v106 = vunpack.c.l.b16 %v68
    %v107 = vunpack.c.l.b16 %v69
    %v108 = vunpack.c.l.b16 %v70
    %v109 = vunpack.c.l.b16 %v71
    %v110 = vunpack.c.l.b16 %v72
    %v111 = vunpack.c.l.b16 %v73
    %v112 = vunpack.c.l.b16 %v74
    %v113 = vunpack.c.l.b16 %v75
    %v114 = vpack.c.b16 %v99, %v98
    %v115 = vpack.c.b16 %v101, %v100
    %v116 = vpack.c.b16 %v103, %v102
    %v117 = vpack.c.b16 %v105, %v104
    %v118 = vpack.c.b16 %v107, %v106
    %v119 = vpack.c.b16 %v109, %v108
    %v120 = vpack.c.b16 %v111, %v110
    %v121 = vpack.c.b16 %v113, %v112
    %v124 = vunpack.c.l.b16 %v76
    %v125 = vunpack.c.l.b16 %v77
    %v126 = vpack.c.b16 %v125, %v124
    %vm128 = vcmask 130048
    %v130 = vsel %vm128, %v114, 0
    %v133 = vsel %vm128, %v115, 0
    %v136 = vsel %vm128, %v116, 0
    %v139 = vsel %vm128, %v117, 0
    %v142 = vsel %vm128, %v118, 0
    %v145 = vsel %vm128, %v119, 0
    %v148 = vsel %vm128, %v120, 0
    %v151 = vsel %vm128, %v121, 0
    %153 = vmatpush.bf16.msra.mxu0 0
    %154 = vmatpush.bf16.msra.mxu0 0
    %155 = vmatpush.bf16.msra.mxu0 0
    %156 = vmatpush.bf16.msra.mxu0 0
    %157 = vmatpush.bf16.msra.mxu0 0
    %158 = vmatpush.bf16.msra.mxu0 0
    %159 = vmatpush.bf16.msra.mxu0 0
    %160 = vmatpush.bf16.msra.mxu0 %v126
    %161 = vmatmul.bf16.gmra.mxu0 %v130
    %v162 = vpop.f32.mrf.mxu0
    %v163 = vadd.f32 %v80, %v162
    %v164 = vpop.f32.mrf.mxu0
    %v165 = vadd.f32 %v80, %v164
    %166 = vmatmul.bf16.gmra.mxu0 %v133
    %v167 = vpop.f32.mrf.mxu0
    %v168 = vadd.f32 %v80, %v167
    %v169 = vpop.f32.mrf.mxu0
    %v170 = vadd.f32 %v80, %v169
    %171 = vmatmul.bf16.gmra.mxu0 %v136
    %v172 = vpop.f32.mrf.mxu0
    %v173 = vadd.f32 %v80, %v172
    %v174 = vpop.f32.mrf.mxu0
    %v175 = vadd.f32 %v80, %v174
    %176 = vmatmul.bf16.gmra.mxu0 %v139
    %v177 = vpop.f32.mrf.mxu0
    %v178 = vadd.f32 %v80, %v177
    %v179 = vpop.f32.mrf.mxu0
    %v180 = vadd.f32 %v80, %v179
    %181 = vmatmul.bf16.gmra.mxu0 %v142
    %v182 = vpop.f32.mrf.mxu0
    %v183 = vadd.f32 %v80, %v182
    %v184 = vpop.f32.mrf.mxu0
    %v185 = vadd.f32 %v80, %v184
    %186 = vmatmul.bf16.gmra.mxu0 %v145
    %v187 = vpop.f32.mrf.mxu0
    %v188 = vadd.f32 %v80, %v187
    %v189 = vpop.f32.mrf.mxu0
    %v190 = vadd.f32 %v80, %v189
    %191 = vmatmul.bf16.gmra.mxu0 %v148
    %v192 = vpop.f32.mrf.mxu0
    %v193 = vadd.f32 %v80, %v192
    %v194 = vpop.f32.mrf.mxu0
    %v195 = vadd.f32 %v80, %v194
    %196 = vmatmul.bf16.gmra.mxu0 %v151
    %v197 = vpop.f32.mrf.mxu0
    %v198 = vadd.f32 %v80, %v197
    %v199 = vpop.f32.mrf.mxu0
    %v200 = vadd.f32 %v80, %v199
    %201 = vdwg.mxu0
    %202 = vst [vmem:[#allocation2] sm:$0xff] %v163
    %203 = vst [vmem:[#allocation2 + $0x8] sm:$0xff] %v165
    %204 = vst [vmem:[#allocation2 + $0x10] sm:$0xff] %v168
    %205 = vst [vmem:[#allocation2 + $0x18] sm:$0xff] %v170
    %206 = vst [vmem:[#allocation2 + $0x20] sm:$0xff] %v173
    %207 = vst [vmem:[#allocation2 + $0x28] sm:$0xff] %v175
    %208 = vst [vmem:[#allocation2 + $0x30] sm:$0xff] %v178
    %209 = vst [vmem:[#allocation2 + $0x38] sm:$0xff] %v180
    %210 = vst [vmem:[#allocation2 + $0x40] sm:$0xff] %v183
    %211 = vst [vmem:[#allocation2 + $0x48] sm:$0xff] %v185
    %212 = vst [vmem:[#allocation2 + $0x50] sm:$0xff] %v188
    %213 = vst [vmem:[#allocation2 + $0x58] sm:$0xff] %v190
    %214 = vst [vmem:[#allocation2 + $0x60] sm:$0xff] %v193
    %215 = vst [vmem:[#allocation2 + $0x68] sm:$0xff] %v195
    %216 = vst [vmem:[#allocation2 + $0x70] sm:$0xff] %v198
    %217 = vst [vmem:[#allocation2 + $0x78] sm:$0xff] %v200
    %v218 = vld [vmem:[#allocation2] sm:$0xff]
    %v219 = vld [vmem:[#allocation2 + $0x8] sm:$0xff]
    %v220 = vld [vmem:[%s2] sm:$0xf]
    %v221 = vld [vmem:[%s2 + $0x4] sm:$0xf]
    %v222 = vld [vmem:[%s2 + $0x8] sm:$0xf]
    %v223 = vld [vmem:[%s2 + $0xc] sm:$0xf]
    %v224 = vld [vmem:[%s2 + $0x10] sm:$0xf]
    %v225 = vld [vmem:[%s2 + $0x14] sm:$0xf]
    %v226 = vld [vmem:[%s2 + $0x18] sm:$0xf]
    %v227 = vld [vmem:[%s2 + $0x1c] sm:$0xf]
    %v228 = vld [vmem:[%s2 + $0x20] sm:$0xf]
    %v229 = vld [vmem:[%s2 + $0x24] sm:$0xf]
    %v230 = vld [vmem:[%s2 + $0x28] sm:$0xf]
    %v231 = vld [vmem:[%s2 + $0x2c] sm:$0xf]
    %v232 = vld [vmem:[%s2 + $0x30] sm:$0xf]
    %v233 = vld [vmem:[%s2 + $0x34] sm:$0xf]
    %v234 = vld [vmem:[%s2 + $0x38] sm:$0xf]
    %v235 = vld [vmem:[%s2 + $0x3c] sm:$0xf]
    %v252 = vunpack.c.l.b16 %v220
    %v253 = vunpack.c.l.b16 %v221
    %v254 = vunpack.c.l.b16 %v222
    %v255 = vunpack.c.l.b16 %v223
    %v256 = vunpack.c.l.b16 %v224
    %v257 = vunpack.c.l.b16 %v225
    %v258 = vunpack.c.l.b16 %v226
    %v259 = vunpack.c.l.b16 %v227
    %v260 = vunpack.c.l.b16 %v228
    %v261 = vunpack.c.l.b16 %v229
    %v262 = vunpack.c.l.b16 %v230
    %v263 = vunpack.c.l.b16 %v231
    %v264 = vunpack.c.l.b16 %v232
    %v265 = vunpack.c.l.b16 %v233
    %v266 = vunpack.c.l.b16 %v234
    %v267 = vunpack.c.l.b16 %v235
    %v268 = vpack.c.b16 %v253, %v252
    %v269 = vpack.c.b16 %v255, %v254
    %v270 = vpack.c.b16 %v257, %v256
    %v271 = vpack.c.b16 %v259, %v258
    %v272 = vpack.c.b16 %v261, %v260
    %v273 = vpack.c.b16 %v263, %v262
    %v274 = vpack.c.b16 %v265, %v264
    %v275 = vpack.c.b16 %v267, %v266
    %284 = vmatpush.bf16.msra.mxu0 %v275
    %285 = vmatpush.bf16.msra.mxu0 %v274
    %286 = vmatpush.bf16.msra.mxu0 %v273
    %287 = vmatpush.bf16.msra.mxu0 %v272
    %288 = vmatpush.bf16.msra.mxu0 %v271
    %289 = vmatpush.bf16.msra.mxu0 %v270
    %290 = vmatpush.bf16.msra.mxu0 %v269
    %291 = vmatpush.bf16.msra.mxu0 %v268
    %292 = vmatmul.bf16.gmra.mxu0 0
    %v293 = vpop.f32.mrf.mxu0
    %v294 = vadd.f32 0.0, %v293
    %v295 = vpop.f32.mrf.mxu0
    %v296 = vadd.f32 0.0, %v295
    %297 = vdwg.mxu0
    %v298 = vadd.f32 %v218, %v294
    %v299 = vadd.f32 %v219, %v296
    %v300 = vtanh.pop %v298
    %v301 = vtanh.pop %v299
    %v302 = vld [vmem:[#allocation2 + $0x10] sm:$0xff]
    %v303 = vld [vmem:[#allocation2 + $0x18] sm:$0xff]
    %v304 = vpack.c.bf16 %v300, %v300
    %v305 = vpack.c.bf16 %v301, %v301
    %v308 = vunpack.c.l.b16 %v304
    %v309 = vunpack.c.l.b16 %v305
    %v310 = vpack.c.b16 %v309, %v308
    %312 = vmatpush.bf16.msra.mxu0 %v275
    %313 = vmatpush.bf16.msra.mxu0 %v274
    %314 = vmatpush.bf16.msra.mxu0 %v273
    %315 = vmatpush.bf16.msra.mxu0 %v272
    %316 = vmatpush.bf16.msra.mxu0 %v271
    %317 = vmatpush.bf16.msra.mxu0 %v270
    %318 = vmatpush.bf16.msra.mxu0 %v269
    %319 = vmatpush.bf16.msra.mxu0 %v268
    %320 = vmatmul.bf16.gmra.mxu0 %v310
    %v321 = vpop.f32.mrf.mxu0
    %v322 = vadd.f32 0.0, %v321
    %v323 = vpop.f32.mrf.mxu0
    %v324 = vadd.f32 0.0, %v323
    %325 = vdwg.mxu0
    %v326 = vadd.f32 %v302, %v322
    %v327 = vadd.f32 %v303, %v324
    %v328 = vtanh.pop %v326
    %v329 = vtanh.pop %v327
    %v330 = vld [vmem:[#allocation3] sm:$0xf]
    %v331 = vld [vmem:[#allocation3 + $0x4] sm:$0xf]
    %v332 = vld [vmem:[#allocation3 + $0x8] sm:$0xf]
    %v333 = vld [vmem:[#allocation3 + $0xc] sm:$0xf]
    %v334 = vld [vmem:[#allocation3 + $0x10] sm:$0xf]
    %v335 = vld [vmem:[#allocation3 + $0x14] sm:$0xf]
    %v336 = vld [vmem:[#allocation3 + $0x18] sm:$0xf]
    %v337 = vld [vmem:[#allocation3 + $0x1c] sm:$0xf]
    %v338 = vld [vmem:[#allocation3 + $0x20] sm:$0xf]
    %v339 = vld [vmem:[#allocation3 + $0x24] sm:$0xf]
    %v340 = vld [vmem:[#allocation3 + $0x28] sm:$0xf]
    %v341 = vld [vmem:[#allocation3 + $0x2c] sm:$0xf]
    %v342 = vld [vmem:[#allocation3 + $0x30] sm:$0xf]
    %v343 = vld [vmem:[#allocation3 + $0x34] sm:$0xf]
    %v344 = vld [vmem:[#allocation3 + $0x38] sm:$0xf]
    %v345 = vld [vmem:[#allocation3 + $0x3c] sm:$0xf]
    %v346 = vld [vmem:[#allocation3 + $0x40] sm:$0xf]
    %v347 = vld [vmem:[#allocation3 + $0x44] sm:$0xf]
    %v348 = vld [vmem:[#allocation3 + $0x48] sm:$0xf]
    %v349 = vld [vmem:[#allocation3 + $0x4c] sm:$0xf]
    %v350 = vld [vmem:[#allocation3 + $0x50] sm:$0xf]
    %v351 = vld [vmem:[#allocation3 + $0x54] sm:$0xf]
    %v352 = vld [vmem:[#allocation3 + $0x58] sm:$0xf]
    %v353 = vld [vmem:[#allocation3 + $0x5c] sm:$0xf]
    %v354 = vld [vmem:[#allocation3 + $0x60] sm:$0xf]
    %v355 = vld [vmem:[#allocation3 + $0x64] sm:$0xf]
    %v356 = vld [vmem:[#allocation3 + $0x68] sm:$0xf]
    %v357 = vld [vmem:[#allocation3 + $0x6c] sm:$0xf]
    %v358 = vld [vmem:[#allocation3 + $0x70] sm:$0xf]
    %v359 = vld [vmem:[#allocation3 + $0x74] sm:$0xf]
    %v360 = vld [vmem:[#allocation3 + $0x78] sm:$0xf]
    %v361 = vld [vmem:[#allocation3 + $0x7c] sm:$0xf]
    %s362 = scalar_lea.vmem %s4, 1
    %v363 = vld [vmem:[%s362] sm:$0x1]
    %v365 = vperm.slane %v363, 0
    %v399 = vunpack.c.l.b16 %v330
    %v400 = vunpack.c.l.b16 %v331
    %v401 = vunpack.c.l.b16 %v332
    %v402 = vunpack.c.l.b16 %v333
    %v403 = vunpack.c.l.b16 %v334
    %v404 = vunpack.c.l.b16 %v335
    %v405 = vunpack.c.l.b16 %v336
    %v406 = vunpack.c.l.b16 %v337
    %v407 = vunpack.c.l.b16 %v338
    %v408 = vunpack.c.l.b16 %v339
    %v409 = vunpack.c.l.b16 %v340
    %v410 = vunpack.c.l.b16 %v341
    %v411 = vunpack.c.l.b16 %v342
    %v412 = vunpack.c.l.b16 %v343
    %v413 = vunpack.c.l.b16 %v344
    %v414 = vunpack.c.l.b16 %v345
    %v415 = vunpack.c.l.b16 %v346
    %v416 = vunpack.c.l.b16 %v347
    %v417 = vunpack.c.l.b16 %v348
    %v418 = vunpack.c.l.b16 %v349
    %v419 = vunpack.c.l.b16 %v350
    %v420 = vunpack.c.l.b16 %v351
    %v421 = vunpack.c.l.b16 %v352
    %v422 = vunpack.c.l.b16 %v353
    %v423 = vunpack.c.l.b16 %v354
    %v424 = vunpack.c.l.b16 %v355
    %v425 = vunpack.c.l.b16 %v356
    %v426 = vunpack.c.l.b16 %v357
    %v427 = vunpack.c.l.b16 %v358
    %v428 = vunpack.c.l.b16 %v359
    %v429 = vunpack.c.l.b16 %v360
    %v430 = vunpack.c.l.b16 %v361
    %v431 = vpack.c.b16 %v400, %v399
    %v432 = vpack.c.b16 %v402, %v401
    %v433 = vpack.c.b16 %v404, %v403
    %v434 = vpack.c.b16 %v406, %v405
    %v435 = vpack.c.b16 %v408, %v407
    %v436 = vpack.c.b16 %v410, %v409
    %v437 = vpack.c.b16 %v412, %v411
    %v438 = vpack.c.b16 %v414, %v413
    %v439 = vpack.c.b16 %v416, %v415
    %v440 = vpack.c.b16 %v418, %v417
    %v441 = vpack.c.b16 %v420, %v419
    %v442 = vpack.c.b16 %v422, %v421
    %v443 = vpack.c.b16 %v424, %v423
    %v444 = vpack.c.b16 %v426, %v425
    %v445 = vpack.c.b16 %v428, %v427
    %v446 = vpack.c.b16 %v430, %v429
    %463 = vmatpush.bf16.msra.mxu0 %v438
    %464 = vmatpush.bf16.msra.mxu0 %v437
    %465 = vmatpush.bf16.msra.mxu0 %v436
    %466 = vmatpush.bf16.msra.mxu0 %v435
    %467 = vmatpush.bf16.msra.mxu0 %v434
    %468 = vmatpush.bf16.msra.mxu0 %v433
    %469 = vmatpush.bf16.msra.mxu0 %v432
    %470 = vmatpush.bf16.msra.mxu0 %v431
    %471 = vmatmul.bf16.gmra.mxu0 %v310
    %v472 = vpop.f32.mrf.mxu0
    %v473 = vadd.f32 %v365, %v472
    %v474 = vpop.f32.mrf.mxu0
    %v475 = vadd.f32 %v365, %v474
    %476 = vdwg.mxu0
    %477 = vmatpush.bf16.msra.mxu0 %v446
    %478 = vmatpush.bf16.msra.mxu0 %v445
    %479 = vmatpush.bf16.msra.mxu0 %v444
    %480 = vmatpush.bf16.msra.mxu0 %v443
    %481 = vmatpush.bf16.msra.mxu0 %v442
    %482 = vmatpush.bf16.msra.mxu0 %v441
    %483 = vmatpush.bf16.msra.mxu0 %v440
    %484 = vmatpush.bf16.msra.mxu0 %v439
    %485 = vmatmul.bf16.gmra.mxu0 0
    %v486 = vpop.f32.mrf.mxu0
    %v487 = vadd.f32 %v473, %v486
    %v488 = vpop.f32.mrf.mxu0
    %v489 = vadd.f32 %v475, %v488
    %490 = vdwg.mxu0
    %v491 = vtanh.pop %v487
    %v492 = vtanh.pop %v489
    %v493 = vld [vmem:[#allocation2 + $0x20] sm:$0xff]
    %v494 = vld [vmem:[#allocation2 + $0x28] sm:$0xff]
    %v495 = vpack.c.bf16 %v328, %v328
    %v496 = vpack.c.bf16 %v329, %v329
    %v499 = vunpack.c.l.b16 %v495
    %v500 = vunpack.c.l.b16 %v496
    %v501 = vpack.c.b16 %v500, %v499
    %503 = vmatpush.bf16.msra.mxu0 %v275
    %504 = vmatpush.bf16.msra.mxu0 %v274
    %505 = vmatpush.bf16.msra.mxu0 %v273
    %506 = vmatpush.bf16.msra.mxu0 %v272
    %507 = vmatpush.bf16.msra.mxu0 %v271
    %508 = vmatpush.bf16.msra.mxu0 %v270
    %509 = vmatpush.bf16.msra.mxu0 %v269
    %510 = vmatpush.bf16.msra.mxu0 %v268
    %511 = vmatmul.bf16.gmra.mxu0 %v501
    %v512 = vpop.f32.mrf.mxu0
    %v513 = vadd.f32 0.0, %v512
    %v514 = vpop.f32.mrf.mxu0
    %v515 = vadd.f32 0.0, %v514
    %516 = vdwg.mxu0
    %v517 = vadd.f32 %v493, %v513
    %v518 = vadd.f32 %v494, %v515
    %v519 = vtanh.pop %v517
    %v520 = vtanh.pop %v518
    %v521 = vpack.c.bf16 %v491, %v491
    %v522 = vpack.c.bf16 %v492, %v492
    %v525 = vunpack.c.l.b16 %v521
    %v526 = vunpack.c.l.b16 %v522
    %v527 = vpack.c.b16 %v526, %v525
    %529 = vmatpush.bf16.msra.mxu0 %v438
    %530 = vmatpush.bf16.msra.mxu0 %v437
    %531 = vmatpush.bf16.msra.mxu0 %v436
    %532 = vmatpush.bf16.msra.mxu0 %v435
    %533 = vmatpush.bf16.msra.mxu0 %v434
    %534 = vmatpush.bf16.msra.mxu0 %v433
    %535 = vmatpush.bf16.msra.mxu0 %v432
    %536 = vmatpush.bf16.msra.mxu0 %v431
    %537 = vmatmul.bf16.gmra.mxu0 %v501
    %v538 = vpop.f32.mrf.mxu0
    %v539 = vadd.f32 %v365, %v538
    %v540 = vpop.f32.mrf.mxu0
    %v541 = vadd.f32 %v365, %v540
    %542 = vdwg.mxu0
    %543 = vmatpush.bf16.msra.mxu0 %v446
    %544 = vmatpush.bf16.msra.mxu0 %v445
    %545 = vmatpush.bf16.msra.mxu0 %v444
    %546 = vmatpush.bf16.msra.mxu0 %v443
    %547 = vmatpush.bf16.msra.mxu0 %v442
    %548 = vmatpush.bf16.msra.mxu0 %v441
    %549 = vmatpush.bf16.msra.mxu0 %v440
    %550 = vmatpush.bf16.msra.mxu0 %v439
    %551 = vmatmul.bf16.gmra.mxu0 %v527
    %v552 = vpop.f32.mrf.mxu0
    %v553 = vadd.f32 %v539, %v552
    %v554 = vpop.f32.mrf.mxu0
    %v555 = vadd.f32 %v541, %v554
    %556 = vdwg.mxu0
    %v557 = vtanh.pop %v553
    %v558 = vtanh.pop %v555
    %v559 = vld [vmem:[#allocation2 + $0x30] sm:$0xff]
    %v560 = vld [vmem:[#allocation2 + $0x38] sm:$0xff]
    %v561 = vpack.c.bf16 %v519, %v519
    %v562 = vpack.c.bf16 %v520, %v520
    %v565 = vunpack.c.l.b16 %v561
    %v566 = vunpack.c.l.b16 %v562
    %v567 = vpack.c.b16 %v566, %v565
    %569 = vmatpush.bf16.msra.mxu0 %v275
    %570 = vmatpush.bf16.msra.mxu0 %v274
    %571 = vmatpush.bf16.msra.mxu0 %v273
    %572 = vmatpush.bf16.msra.mxu0 %v272
    %573 = vmatpush.bf16.msra.mxu0 %v271
    %574 = vmatpush.bf16.msra.mxu0 %v270
    %575 = vmatpush.bf16.msra.mxu0 %v269
    %576 = vmatpush.bf16.msra.mxu0 %v268
    %577 = vmatmul.bf16.gmra.mxu0 %v567
    %v578 = vpop.f32.mrf.mxu0
    %v579 = vadd.f32 0.0, %v578
    %v580 = vpop.f32.mrf.mxu0
    %v581 = vadd.f32 0.0, %v580
    %582 = vdwg.mxu0
    %v583 = vadd.f32 %v559, %v579
    %v584 = vadd.f32 %v560, %v581
    %v585 = vtanh.pop %v583
    %v586 = vtanh.pop %v584
    %v587 = vpack.c.bf16 %v557, %v557
    %v588 = vpack.c.bf16 %v558, %v558
    %v591 = vunpack.c.l.b16 %v587
    %v592 = vunpack.c.l.b16 %v588
    %v593 = vpack.c.b16 %v592, %v591
    %595 = vmatpush.bf16.msra.mxu0 %v438
    %596 = vmatpush.bf16.msra.mxu0 %v437
    %597 = vmatpush.bf16.msra.mxu0 %v436
    %598 = vmatpush.bf16.msra.mxu0 %v435
    %599 = vmatpush.bf16.msra.mxu0 %v434
    %600 = vmatpush.bf16.msra.mxu0 %v433
    %601 = vmatpush.bf16.msra.mxu0 %v432
    %602 = vmatpush.bf16.msra.mxu0 %v431
    %603 = vmatmul.bf16.gmra.mxu0 %v567
    %v604 = vpop.f32.mrf.mxu0
    %v605 = vadd.f32 %v365, %v604
    %v606 = vpop.f32.mrf.mxu0
    %v607 = vadd.f32 %v365, %v606
    %608 = vdwg.mxu0
    %609 = vmatpush.bf16.msra.mxu0 %v446
    %610 = vmatpush.bf16.msra.mxu0 %v445
    %611 = vmatpush.bf16.msra.mxu0 %v444
    %612 = vmatpush.bf16.msra.mxu0 %v443
    %613 = vmatpush.bf16.msra.mxu0 %v442
    %614 = vmatpush.bf16.msra.mxu0 %v441
    %615 = vmatpush.bf16.msra.mxu0 %v440
    %616 = vmatpush.bf16.msra.mxu0 %v439
    %617 = vmatmul.bf16.gmra.mxu0 %v593
    %v618 = vpop.f32.mrf.mxu0
    %v619 = vadd.f32 %v605, %v618
    %v620 = vpop.f32.mrf.mxu0
    %v621 = vadd.f32 %v607, %v620
    %622 = vdwg.mxu0
    %v623 = vtanh.pop %v619
    %v624 = vtanh.pop %v621
    %v625 = vld [vmem:[#allocation2 + $0x40] sm:$0xff]
    %v626 = vld [vmem:[#allocation2 + $0x48] sm:$0xff]
    %v627 = vpack.c.bf16 %v585, %v585
    %v628 = vpack.c.bf16 %v586, %v586
    %v631 = vunpack.c.l.b16 %v627
    %v632 = vunpack.c.l.b16 %v628
    %v633 = vpack.c.b16 %v632, %v631
    %635 = vmatpush.bf16.msra.mxu0 %v275
    %636 = vmatpush.bf16.msra.mxu0 %v274
    %637 = vmatpush.bf16.msra.mxu0 %v273
    %638 = vmatpush.bf16.msra.mxu0 %v272
    %639 = vmatpush.bf16.msra.mxu0 %v271
    %640 = vmatpush.bf16.msra.mxu0 %v270
    %641 = vmatpush.bf16.msra.mxu0 %v269
    %642 = vmatpush.bf16.msra.mxu0 %v268
    %643 = vmatmul.bf16.gmra.mxu0 %v633
    %v644 = vpop.f32.mrf.mxu0
    %v645 = vadd.f32 0.0, %v644
    %v646 = vpop.f32.mrf.mxu0
    %v647 = vadd.f32 0.0, %v646
    %648 = vdwg.mxu0
    %v649 = vadd.f32 %v625, %v645
    %v650 = vadd.f32 %v626, %v647
    %v651 = vtanh.pop %v649
    %v652 = vtanh.pop %v650
    %v653 = vpack.c.bf16 %v623, %v623
    %v654 = vpack.c.bf16 %v624, %v624
    %v657 = vunpack.c.l.b16 %v653
    %v658 = vunpack.c.l.b16 %v654
    %v659 = vpack.c.b16 %v658, %v657
    %661 = vmatpush.bf16.msra.mxu0 %v438
    %662 = vmatpush.bf16.msra.mxu0 %v437
    %663 = vmatpush.bf16.msra.mxu0 %v436
    %664 = vmatpush.bf16.msra.mxu0 %v435
    %665 = vmatpush.bf16.msra.mxu0 %v434
    %666 = vmatpush.bf16.msra.mxu0 %v433
    %667 = vmatpush.bf16.msra.mxu0 %v432
    %668 = vmatpush.bf16.msra.mxu0 %v431
    %669 = vmatmul.bf16.gmra.mxu0 %v633
    %v670 = vpop.f32.mrf.mxu0
    %v671 = vadd.f32 %v365, %v670
    %v672 = vpop.f32.mrf.mxu0
    %v673 = vadd.f32 %v365, %v672
    %674 = vdwg.mxu0
    %675 = vmatpush.bf16.msra.mxu0 %v446
    %676 = vmatpush.bf16.msra.mxu0 %v445
    %677 = vmatpush.bf16.msra.mxu0 %v444
    %678 = vmatpush.bf16.msra.mxu0 %v443
    %679 = vmatpush.bf16.msra.mxu0 %v442
    %680 = vmatpush.bf16.msra.mxu0 %v441
    %681 = vmatpush.bf16.msra.mxu0 %v440
    %682 = vmatpush.bf16.msra.mxu0 %v439
    %683 = vmatmul.bf16.gmra.mxu0 %v659
    %v684 = vpop.f32.mrf.mxu0
    %v685 = vadd.f32 %v671, %v684
    %v686 = vpop.f32.mrf.mxu0
    %v687 = vadd.f32 %v673, %v686
    %688 = vdwg.mxu0
    %v689 = vtanh.pop %v685
    %v690 = vtanh.pop %v687
    %v691 = vld [vmem:[#allocation2 + $0x50] sm:$0xff]
    %v692 = vld [vmem:[#allocation2 + $0x58] sm:$0xff]
    %v693 = vpack.c.bf16 %v651, %v651
    %v694 = vpack.c.bf16 %v652, %v652
    %v697 = vunpack.c.l.b16 %v693
    %v698 = vunpack.c.l.b16 %v694
    %v699 = vpack.c.b16 %v698, %v697
    %701 = vmatpush.bf16.msra.mxu0 %v275
    %702 = vmatpush.bf16.msra.mxu0 %v274
    %703 = vmatpush.bf16.msra.mxu0 %v273
    %704 = vmatpush.bf16.msra.mxu0 %v272
    %705 = vmatpush.bf16.msra.mxu0 %v271
    %706 = vmatpush.bf16.msra.mxu0 %v270
    %707 = vmatpush.bf16.msra.mxu0 %v269
    %708 = vmatpush.bf16.msra.mxu0 %v268
    %709 = vmatmul.bf16.gmra.mxu0 %v699
    %v710 = vpop.f32.mrf.mxu0
    %v711 = vadd.f32 0.0, %v710
    %v712 = vpop.f32.mrf.mxu0
    %v713 = vadd.f32 0.0, %v712
    %714 = vdwg.mxu0
    %v715 = vadd.f32 %v691, %v711
    %v716 = vadd.f32 %v692, %v713
    %v717 = vtanh.pop %v715
    %v718 = vtanh.pop %v716
    %v719 = vpack.c.bf16 %v689, %v689
    %v720 = vpack.c.bf16 %v690, %v690
    %v723 = vunpack.c.l.b16 %v719
    %v724 = vunpack.c.l.b16 %v720
    %v725 = vpack.c.b16 %v724, %v723
    %727 = vmatpush.bf16.msra.mxu0 %v438
    %728 = vmatpush.bf16.msra.mxu0 %v437
    %729 = vmatpush.bf16.msra.mxu0 %v436
    %730 = vmatpush.bf16.msra.mxu0 %v435
    %731 = vmatpush.bf16.msra.mxu0 %v434
    %732 = vmatpush.bf16.msra.mxu0 %v433
    %733 = vmatpush.bf16.msra.mxu0 %v432
    %734 = vmatpush.bf16.msra.mxu0 %v431
    %735 = vmatmul.bf16.gmra.mxu0 %v699
    %v736 = vpop.f32.mrf.mxu0
    %v737 = vadd.f32 %v365, %v736
    %v738 = vpop.f32.mrf.mxu0
    %v739 = vadd.f32 %v365, %v738
    %740 = vdwg.mxu0
    %741 = vmatpush.bf16.msra.mxu0 %v446
    %742 = vmatpush.bf16.msra.mxu0 %v445
    %743 = vmatpush.bf16.msra.mxu0 %v444
    %744 = vmatpush.bf16.msra.mxu0 %v443
    %745 = vmatpush.bf16.msra.mxu0 %v442
    %746 = vmatpush.bf16.msra.mxu0 %v441
    %747 = vmatpush.bf16.msra.mxu0 %v440
    %748 = vmatpush.bf16.msra.mxu0 %v439
    %749 = vmatmul.bf16.gmra.mxu0 %v725
    %v750 = vpop.f32.mrf.mxu0
    %v751 = vadd.f32 %v737, %v750
    %v752 = vpop.f32.mrf.mxu0
    %v753 = vadd.f32 %v739, %v752
    %754 = vdwg.mxu0
    %v755 = vtanh.pop %v751
    %v756 = vtanh.pop %v753
    %v757 = vld [vmem:[#allocation2 + $0x60] sm:$0xff]
    %v758 = vld [vmem:[#allocation2 + $0x68] sm:$0xff]
    %v759 = vpack.c.bf16 %v717, %v717
    %v760 = vpack.c.bf16 %v718, %v718
    %v763 = vunpack.c.l.b16 %v759
    %v764 = vunpack.c.l.b16 %v760
    %v765 = vpack.c.b16 %v764, %v763
    %767 = vmatpush.bf16.msra.mxu0 %v275
    %768 = vmatpush.bf16.msra.mxu0 %v274
    %769 = vmatpush.bf16.msra.mxu0 %v273
    %770 = vmatpush.bf16.msra.mxu0 %v272
    %771 = vmatpush.bf16.msra.mxu0 %v271
    %772 = vmatpush.bf16.msra.mxu0 %v270
    %773 = vmatpush.bf16.msra.mxu0 %v269
    %774 = vmatpush.bf16.msra.mxu0 %v268
    %775 = vmatmul.bf16.gmra.mxu0 %v765
    %v776 = vpop.f32.mrf.mxu0
    %v777 = vadd.f32 0.0, %v776
    %v778 = vpop.f32.mrf.mxu0
    %v779 = vadd.f32 0.0, %v778
    %780 = vdwg.mxu0
    %v781 = vadd.f32 %v757, %v777
    %v782 = vadd.f32 %v758, %v779
    %v783 = vtanh.pop %v781
    %v784 = vtanh.pop %v782
    %v785 = vpack.c.bf16 %v755, %v755
    %v786 = vpack.c.bf16 %v756, %v756
    %v789 = vunpack.c.l.b16 %v785
    %v790 = vunpack.c.l.b16 %v786
    %v791 = vpack.c.b16 %v790, %v789
    %793 = vmatpush.bf16.msra.mxu0 %v438
    %794 = vmatpush.bf16.msra.mxu0 %v437
    %795 = vmatpush.bf16.msra.mxu0 %v436
    %796 = vmatpush.bf16.msra.mxu0 %v435
    %797 = vmatpush.bf16.msra.mxu0 %v434
    %798 = vmatpush.bf16.msra.mxu0 %v433
    %799 = vmatpush.bf16.msra.mxu0 %v432
    %800 = vmatpush.bf16.msra.mxu0 %v431
    %801 = vmatmul.bf16.gmra.mxu0 %v765
    %v802 = vpop.f32.mrf.mxu0
    %v803 = vadd.f32 %v365, %v802
    %v804 = vpop.f32.mrf.mxu0
    %v805 = vadd.f32 %v365, %v804
    %806 = vdwg.mxu0
    %807 = vmatpush.bf16.msra.mxu0 %v446
    %808 = vmatpush.bf16.msra.mxu0 %v445
    %809 = vmatpush.bf16.msra.mxu0 %v444
    %810 = vmatpush.bf16.msra.mxu0 %v443
    %811 = vmatpush.bf16.msra.mxu0 %v442
    %812 = vmatpush.bf16.msra.mxu0 %v441
    %813 = vmatpush.bf16.msra.mxu0 %v440
    %814 = vmatpush.bf16.msra.mxu0 %v439
    %815 = vmatmul.bf16.gmra.mxu0 %v791
    %v816 = vpop.f32.mrf.mxu0
    %v817 = vadd.f32 %v803, %v816
    %v818 = vpop.f32.mrf.mxu0
    %v819 = vadd.f32 %v805, %v818
    %820 = vdwg.mxu0
    %v821 = vtanh.pop %v817
    %v822 = vtanh.pop %v819
    %v823 = vld [vmem:[#allocation2 + $0x70] sm:$0xff]
    %v824 = vld [vmem:[#allocation2 + $0x78] sm:$0xff]
    %v825 = vpack.c.bf16 %v783, %v783
    %v826 = vpack.c.bf16 %v784, %v784
    %v829 = vunpack.c.l.b16 %v825
    %v830 = vunpack.c.l.b16 %v826
    %v831 = vpack.c.b16 %v830, %v829
    %833 = vmatpush.bf16.msra.mxu0 %v275
    %834 = vmatpush.bf16.msra.mxu0 %v274
    %835 = vmatpush.bf16.msra.mxu0 %v273
    %836 = vmatpush.bf16.msra.mxu0 %v272
    %837 = vmatpush.bf16.msra.mxu0 %v271
    %838 = vmatpush.bf16.msra.mxu0 %v270
    %839 = vmatpush.bf16.msra.mxu0 %v269
    %840 = vmatpush.bf16.msra.mxu0 %v268
    %841 = vmatmul.bf16.gmra.mxu0 %v831
    %v842 = vpop.f32.mrf.mxu0
    %v843 = vadd.f32 0.0, %v842
    %v844 = vpop.f32.mrf.mxu0
    %v845 = vadd.f32 0.0, %v844
    %846 = vdwg.mxu0
    %v847 = vadd.f32 %v823, %v843
    %v848 = vadd.f32 %v824, %v845
    %v849 = vtanh.pop %v847
    %v850 = vtanh.pop %v848
    %v851 = vpack.c.bf16 %v821, %v821
    %v852 = vpack.c.bf16 %v822, %v822
    %v855 = vunpack.c.l.b16 %v851
    %v856 = vunpack.c.l.b16 %v852
    %v857 = vpack.c.b16 %v856, %v855
    %859 = vmatpush.bf16.msra.mxu0 %v438
    %860 = vmatpush.bf16.msra.mxu0 %v437
    %861 = vmatpush.bf16.msra.mxu0 %v436
    %862 = vmatpush.bf16.msra.mxu0 %v435
    %863 = vmatpush.bf16.msra.mxu0 %v434
    %864 = vmatpush.bf16.msra.mxu0 %v433
    %865 = vmatpush.bf16.msra.mxu0 %v432
    %866 = vmatpush.bf16.msra.mxu0 %v431
    %867 = vmatmul.bf16.gmra.mxu0 %v831
    %v868 = vpop.f32.mrf.mxu0
    %v869 = vadd.f32 %v365, %v868
    %v870 = vpop.f32.mrf.mxu0
    %v871 = vadd.f32 %v365, %v870
    %872 = vdwg.mxu0
    %873 = vmatpush.bf16.msra.mxu0 %v446
    %874 = vmatpush.bf16.msra.mxu0 %v445
    %875 = vmatpush.bf16.msra.mxu0 %v444
    %876 = vmatpush.bf16.msra.mxu0 %v443
    %877 = vmatpush.bf16.msra.mxu0 %v442
    %878 = vmatpush.bf16.msra.mxu0 %v441
    %879 = vmatpush.bf16.msra.mxu0 %v440
    %880 = vmatpush.bf16.msra.mxu0 %v439
    %881 = vmatmul.bf16.gmra.mxu0 %v857
    %v882 = vpop.f32.mrf.mxu0
    %v883 = vadd.f32 %v869, %v882
    %v884 = vpop.f32.mrf.mxu0
    %v885 = vadd.f32 %v871, %v884
    %886 = vdwg.mxu0
    %v887 = vtanh.pop %v883
    %v888 = vtanh.pop %v885
    %v889 = vpack.c.bf16 %v849, %v849
    %v890 = vpack.c.bf16 %v850, %v850
    %v891 = vpack.c.bf16 %v887, %v887
    %v892 = vpack.c.bf16 %v888, %v888
    %v895 = vunpack.c.l.b16 %v889
    %v896 = vunpack.c.l.b16 %v890
    %v897 = vpack.c.b16 %v896, %v895
    %v901 = vunpack.c.l.b16 %v891
    %v902 = vunpack.c.l.b16 %v892
    %v903 = vpack.c.b16 %v902, %v901
    %905 = vmatpush.bf16.msra.mxu0 %v438
    %906 = vmatpush.bf16.msra.mxu0 %v437
    %907 = vmatpush.bf16.msra.mxu0 %v436
    %908 = vmatpush.bf16.msra.mxu0 %v435
    %909 = vmatpush.bf16.msra.mxu0 %v434
    %910 = vmatpush.bf16.msra.mxu0 %v433
    %911 = vmatpush.bf16.msra.mxu0 %v432
    %912 = vmatpush.bf16.msra.mxu0 %v431
    %913 = vmatmul.bf16.gmra.mxu0 %v897
    %v914 = vpop.f32.mrf.mxu0
    %v915 = vadd.f32 %v365, %v914
    %v916 = vpop.f32.mrf.mxu0
    %v917 = vadd.f32 %v365, %v916
    %918 = vdwg.mxu0
    %919 = vmatpush.bf16.msra.mxu0 %v446
    %920 = vmatpush.bf16.msra.mxu0 %v445
    %921 = vmatpush.bf16.msra.mxu0 %v444
    %922 = vmatpush.bf16.msra.mxu0 %v443
    %923 = vmatpush.bf16.msra.mxu0 %v442
    %924 = vmatpush.bf16.msra.mxu0 %v441
    %925 = vmatpush.bf16.msra.mxu0 %v440
    %926 = vmatpush.bf16.msra.mxu0 %v439
    %927 = vmatmul.bf16.gmra.mxu0 %v903
    %v928 = vpop.f32.mrf.mxu0
    %v929 = vadd.f32 %v915, %v928
    %v930 = vpop.f32.mrf.mxu0
    %v931 = vadd.f32 %v917, %v930
    %932 = vdwg.mxu0
    %v933 = vtanh.pop %v929
    %v934 = vtanh.pop %v931
    %v935 = vpack.c.bf16 %v934, %v933
    %v936 = vld [vmem:[#allocation6] sm:$0xf]
    %v937 = vld [vmem:[#allocation6 + $0x4] sm:$0xf]
    %v938 = vld [vmem:[#allocation6 + $0x8] sm:$0xf]
    %v939 = vld [vmem:[#allocation6 + $0xc] sm:$0xf]
    %v940 = vld [vmem:[#allocation6 + $0x10] sm:$0xf]
    %v941 = vld [vmem:[#allocation6 + $0x14] sm:$0xf]
    %v942 = vld [vmem:[#allocation6 + $0x18] sm:$0xf]
    %v943 = vld [vmem:[#allocation6 + $0x1c] sm:$0xf]
    %v944 = vld [vmem:[#allocation6 + $0x20] sm:$0xf]
    %v945 = vld [vmem:[#allocation6 + $0x24] sm:$0xf]
    %v946 = vld [vmem:[#allocation6 + $0x28] sm:$0xf]
    %v947 = vld [vmem:[#allocation6 + $0x2c] sm:$0xf]
    %v948 = vld [vmem:[#allocation6 + $0x30] sm:$0xf]
    %v949 = vld [vmem:[#allocation6 + $0x34] sm:$0xf]
    %v950 = vld [vmem:[#allocation6 + $0x38] sm:$0xf]
    %v951 = vld [vmem:[#allocation6 + $0x3c] sm:$0xf]
    %v952 = vld [vmem:[%s6] sm:$0x1]
    %v954 = vperm.slane %v952, 0
    %v972 = vunpack.c.l.b16 %v936
    %v973 = vunpack.c.l.b16 %v937
    %v974 = vunpack.c.l.b16 %v938
    %v975 = vunpack.c.l.b16 %v939
    %v976 = vunpack.c.l.b16 %v940
    %v977 = vunpack.c.l.b16 %v941
    %v978 = vunpack.c.l.b16 %v942
    %v979 = vunpack.c.l.b16 %v943
    %v980 = vunpack.c.l.b16 %v944
    %v981 = vunpack.c.l.b16 %v945
    %v982 = vunpack.c.l.b16 %v946
    %v983 = vunpack.c.l.b16 %v947
    %v984 = vunpack.c.l.b16 %v948
    %v985 = vunpack.c.l.b16 %v949
    %v986 = vunpack.c.l.b16 %v950
    %v987 = vunpack.c.l.b16 %v951
    %v988 = vpack.c.b16 %v973, %v972
    %v989 = vpack.c.b16 %v975, %v974
    %v990 = vpack.c.b16 %v977, %v976
    %v991 = vpack.c.b16 %v979, %v978
    %v992 = vpack.c.b16 %v981, %v980
    %v993 = vpack.c.b16 %v983, %v982
    %v994 = vpack.c.b16 %v985, %v984
    %v995 = vpack.c.b16 %v987, %v986
    %1004 = vmatpush.bf16.msra.mxu0 %v995
    %1005 = vmatpush.bf16.msra.mxu0 %v994
    %1006 = vmatpush.bf16.msra.mxu0 %v993
    %1007 = vmatpush.bf16.msra.mxu0 %v992
    %1008 = vmatpush.bf16.msra.mxu0 %v991
    %1009 = vmatpush.bf16.msra.mxu0 %v990
    %1010 = vmatpush.bf16.msra.mxu0 %v989
    %1011 = vmatpush.bf16.msra.mxu0 %v988
    %1012 = vmatmul.bf16.gmra.mxu0 %v935
    %v1013 = vpop.f32.mrf.mxu0
    %v1014 = vadd.f32 %v954, %v1013
    %v1015 = vpop.f32.mrf.mxu0
    %v1016 = vadd.f32 %v954, %v1015
    %1017 = vdwg.mxu0
    %1018 = vst [vmem:[#allocation8] sm:$0xff] %v1014
    %1019 = vst [vmem:[#allocation8 + $0x8] sm:$0xff] %v1016
    // Predicated region
    $region38: #{tpu_custom_call.1} parent=1 // pred_check
      _
    $region39: #{tpu_custom_call.1} parent=1 // pred_check_branch
      %1021 = sbr.rel (0) target = $region41
    $region40: #{tpu_custom_call.1} parent=1 // pred_region
      %1023 = vsyncadd [#allocation5], 0
      %s1024 = sshll.u32 [#allocation8], 4
      %s1025 = int_to_ptr.vmem [resolvable:$true] %s1024
      %s1026 = sshll.u32 %s7, 4
      %s1027 = int_to_ptr.hbm [resolvable:$true] %s1026
      %1032 = dma.vmem_to_hbm [thread:$0]  %s1025, 256, %s1027, [#allocation5], 128, 128, 8
    $region41: #{tpu_custom_call.1} parent=1 // pred_fallthru
      _
    // Predicated region
    $region42: #{tpu_custom_call.1} parent=1 // pred_check
      _
    $region43: #{tpu_custom_call.1} parent=1 // pred_check_branch
      %1034 = sbr.rel (0) target = $region45
    $region44: #{tpu_custom_call.1} parent=1 // pred_region
      %1036 = dma.done [#allocation5], 256
    $region45: #{tpu_custom_call.1} parent=1 // pred_fallthru
      _
    %1037 = vsyncpa [#allocation4], 1
    %1038 = vsyncpa [#allocation7], 1
    %1039 = vsyncpa [#allocation5], 1

</llo_original>
